<compile_context>
chip_gen: v7x
topology: tpu7x:2x2x1
jax: 0.10.0
libtpu: 0.0.40
codegen_flags: <defaults>
</compile_context>

<pallas_src>
import functools

import jax
import jax.numpy as jnp
from jax import lax
from jax.experimental import pallas as pl
from jax.experimental.pallas import tpu as pltpu


def _round_up(x, m):
    return (x + m - 1) // m * m


def _vmem_capacity_bytes():
    try:
        cap = getattr(pltpu.get_tpu_info(), "vmem_capacity_bytes", None)
        if cap:
            return int(cap)
    except Exception:
        pass
    return 64 * 1024 * 1024          # conservative default (v7x per-TC VMEM)


def _lq_tile_cap():
    # v6e / v7x MXUs are 256 wide; v5e (and unknown chips) get the safe 128.
    try:
        kind = jax.devices()[0].device_kind.lower()
    except Exception:
        kind = ""
    return 256 if ("v6" in kind or "v7" in kind) else 128


def _largest_divisor_leq(n, cap):
    best = 1
    for d in range(1, min(n, cap) + 1):
        if n % d == 0:
            best = d
    return best


def _attention_kernel(out_ref, ctx_ref, w_mix_ref, w_out_ref, b_ref, mask_ref,
                      o_ref, attn_ref, *, need_mask, approx_recip):
    # out_ref:   (Bt, Lq_t, Dp)  decoder output tile (MXU dtype)
    # ctx_ref:   (Bt, Lkp,  Dp)  encoder context tile (MXU dtype)
    # w_mix_ref: (Dp, Dp)        W[:, :D].T  (multiplies mix)       [VMEM const]
    # w_out_ref: (Dp, Dp)        W[:, D:].T  (multiplies output)    [VMEM const]
    # b_ref:     (1, Dp)         bias                               [VMEM const]
    # mask_ref:  (1, 1, Lkp)     additive Lk-padding mask (0/-1e30) [VMEM const]
    bt, lq, dp = out_ref.shape

    out_x = out_ref[...]
    ctx_x = ctx_ref[...]

    # scores = output @ context^T  (batched; contract last dims, no transpose)
    scores = lax.dot_general(
        out_x, ctx_x,
        dimension_numbers=(((2,), (2,)), ((0,), (0,))),
        preferred_element_type=jnp.float32)                # (Bt, Lq_t, Lkp) f32

    if need_mask:
        scores = scores + mask_ref[...]                    # mask Lk padding cols
    # TODO(synk): user-supplied mask (self.mask / set_mask) not implemented —
    # module default is mask=None.

    # softmax over Lk (f32 on the VPU; reciprocal on the EUP when approx=True)
    m = jnp.max(scores, axis=-1, keepdims=True)
    e = jnp.exp(scores - m)
    denom = jnp.sum(e, axis=-1, keepdims=True)
    attn = e * pl.reciprocal(denom, approx=approx_recip)
    attn_ref[...] = attn.astype(attn_ref.dtype)

    # mix = attn @ context   (batched)
    mix = lax.dot_general(
        attn.astype(ctx_x.dtype), ctx_x,
        dimension_numbers=(((2,), (1,)), ((0,), (0,))),
        preferred_element_type=jnp.float32)                # (Bt, Lq_t, Dp) f32

    # Fused linear: fold (Bt, Lq_t) into one wide M dimension for the MXU.
    mix2d = mix.astype(w_mix_ref.dtype).reshape(bt * lq, dp)
    out2d = out_x.reshape(bt * lq, dp)
    y = (jnp.dot(mix2d, w_mix_ref[...], preferred_element_type=jnp.float32)
         + jnp.dot(out2d, w_out_ref[...], preferred_element_type=jnp.float32)
         + b_ref[...].astype(jnp.float32))
    o_ref[...] = jnp.tanh(y).reshape(bt, lq, dp).astype(o_ref.dtype)


def attention_forward(output, context, weight, bias, *,
                      mxu_dtype=jnp.bfloat16, approx_softmax=True,
                      attn_dtype=None, block_b=None):
    """Pallas forward pass.

    output:  (B, Lq, D) float32   decoder output features
    context: (B, Lk, D) float32   encoder context features
    weight:  (D, 2D)    float32   (nn.Linear(dim*2, dim).weight layout)
    bias:    (D,)       float32
    Returns: attended (B, Lq, D) output.dtype, attn (B, Lq, Lk) attn_dtype.
    Note: with approx_softmax=True / bf16 attn the returned attention rows do
    not sum *exactly* to 1.
    """
    B, Lq, D = output.shape
    _, Lk, _ = context.shape
    if attn_dtype is None:
        attn_dtype = mxu_dtype                 # bf16 attn on the fast path

    # ---- Lane-dense / MXU-aligned padding ---------------------------------
    Dp = _round_up(D, 128)                     # lane dim of activations/weights
    Lkp = _round_up(Lk, 128)                   # lane dim of the attn output
    Lq8 = _round_up(Lq, 8)                     # sublane alignment
    lq_cap = _lq_tile_cap()                    # 256 on v6e/v7x, 128 on v5e
    Lq_t = Lq8 if Lq8 <= lq_cap else lq_cap
    Lqp = _round_up(Lq8, Lq_t)
    n_q = Lqp // Lq_t

    # ---- Generation-aware VMEM budget --------------------------------------
    vmem_cap = _vmem_capacity_bytes()                      # physical per-TC
    vmem_limit = min(int(vmem_cap * 0.80), vmem_cap - (8 << 20))
    act_it = jnp.dtype(mxu_dtype).itemsize
    attn_it = jnp.dtype(attn_dtype).itemsize
    out_it = jnp.dtype(output.dtype).itemsize
    # Single-buffered constants (whole-array VMEM operands).
    const_bytes = 2 * Dp * Dp * act_it + Dp * 4 + Lkp * 4
    budget = max(vmem_limit - const_bytes - (12 << 20), 0)  # Mosaic headroom
    # Bytes per batch element of a block: double-buffered I/O tiles + f32 temps.
    per_b = (2 * (Lq_t * Dp + Lkp * Dp) * act_it
             + 2 * (Lq_t * Dp * out_it + Lq_t * Lkp * attn_it)
             + 4 * (2 * Lq_t * Lkp + 2 * Lq_t * Dp))
    if per_b > budget:
        # TODO(synk): add an Lk-tiled (online-softmax) reduction path so long
        # contexts degrade gracefully instead of failing here.
        raise ValueError(
            f"Attention block for Lk={Lk}, D={D} needs ~{per_b} B of VMEM but "
            f"only ~{budget} B are available; Lk tiling not implemented.")

    # ---- Batch tile: amortize per-step overhead, keep VMEM in budget -------
    if block_b is None:
        bt = max(1, -(-256 // Lq_t))                 # aim for >=256 fused rows
        bt = min(bt, B, max(1, budget // per_b))
        # Prefer a bt that divides B (skips the output-padding slice), unless
        # that costs more than half the tile.
        bt_div = _largest_divisor_leq(B, bt)
        if 2 * bt_div >= bt:
            bt = bt_div
    else:
        bt = max(1, min(block_b, B))
    # Make sure the parallel grid has >=2 steps so both v7x TensorCores work.
    while bt > 1 and (-(-B // bt)) * n_q < 2:
        bt = (bt + 1) // 2
    Bp = _round_up(B, bt)

    # ---- Pad + cast operands in the wrapper (halves DMA bytes for bf16) ----
    out_p = jnp.pad(output, ((0, Bp - B), (0, Lqp - Lq), (0, Dp - D))
                    ).astype(mxu_dtype)
    ctx_p = jnp.pad(context, ((0, Bp - B), (0, Lkp - Lk), (0, Dp - D))
                    ).astype(mxu_dtype)

    # Split/transpose the linear weight so the kernel skips the concat:
    # [mix, output] @ W.T == mix @ W[:, :D].T + output @ W[:, D:].T
    w_mix = jnp.pad(weight[:, :D].T, ((0, Dp - D), (0, Dp - D))).astype(mxu_dtype)
    w_out = jnp.pad(weight[:, D:].T, ((0, Dp - D), (0, Dp - D))).astype(mxu_dtype)
    b2d = jnp.pad(bias, (0, Dp - D)).reshape(1, Dp).astype(jnp.float32)

    # Precomputed additive mask for the Lk padding columns (0 valid, -1e30 pad).
    need_mask = Lkp > Lk
    mask = jnp.where(jnp.arange(Lkp) < Lk, 0.0, -1e30).astype(jnp.float32)
    mask = mask.reshape(1, 1, Lkp)

    kernel = functools.partial(_attention_kernel, need_mask=need_mask,
                               approx_recip=approx_softmax)

    out_shapes = (
        jax.ShapeDtypeStruct((Bp, Lqp, Dp), output.dtype),
        jax.ShapeDtypeStruct((Bp, Lqp, Lkp), attn_dtype),
    )

    # Whole-array VMEM operands -> single-buffered constants.
    vmem_const = pl.BlockSpec(memory_space=pltpu.MemorySpace.VMEM)

    attended_p, attn_p = pl.pallas_call(
        kernel,
        out_shape=out_shapes,
        grid=(Bp // bt, n_q),
        in_specs=[
            pl.BlockSpec((bt, Lq_t, Dp), lambda b, q: (b, q, 0)),
            pl.BlockSpec((bt, Lkp, Dp), lambda b, q: (b, 0, 0)),
            vmem_const,      # w_mix
            vmem_const,      # w_out
            vmem_const,      # bias
            vmem_const,      # Lk-padding additive mask
        ],
        out_specs=[
            pl.BlockSpec((bt, Lq_t, Dp), lambda b, q: (b, q, 0)),
            pl.BlockSpec((bt, Lq_t, Lkp), lambda b, q: (b, q, 0)),
        ],
        compiler_params=pltpu.CompilerParams(
            dimension_semantics=("parallel", "parallel"),
            vmem_limit_bytes=int(vmem_limit)),
    )(out_p, ctx_p, w_mix, w_out, b2d, mask)

    # Only slice when padding was actually added (the slice is an extra HBM
    # round-trip for a memory-bound kernel).
    attended = (attended_p if attended_p.shape == (B, Lq, D)
                else attended_p[:B, :Lq, :D])
    attn = attn_p if attn_p.shape == (B, Lq, Lk) else attn_p[:B, :Lq, :Lk]
    return attended, attn


def attention_reference(output, context, weight, bias):
    """Plain-JAX reference replicating the PyTorch forward (mask=None)."""
    hp = lax.Precision.HIGHEST
    scores = jnp.einsum("bqd,bkd->bqk", output, context, precision=hp)
    attn = jax.nn.softmax(scores, axis=-1)
    mix = jnp.einsum("bqk,bkd->bqd", attn, context, precision=hp)
    combined = jnp.concatenate([mix, output], axis=-1)
    out = jnp.tanh(jnp.dot(combined, weight.T, precision=hp) + bias)
    return out, attn


if __name__ == "__main__":
    B, Lq, Lk, D = 2, 8, 8, 32

    key = jax.random.PRNGKey(0)
    k_out, k_ctx, k_w, k_b = jax.random.split(key, 4)

    output = jax.random.normal(k_out, (B, Lq, D), dtype=jnp.float32)
    context = jax.random.normal(k_ctx, (B, Lk, D), dtype=jnp.float32)

    # Deterministic nn.Linear(dim*2, dim)-style init: U(-1/sqrt(fan_in), +)
    fan_in = 2 * D
    bound = 1.0 / float(jnp.sqrt(jnp.float32(fan_in)))
    weight = jax.random.uniform(k_w, (D, 2 * D), jnp.float32, -bound, bound)
    bias = jax.random.uniform(k_b, (D,), jnp.float32, -bound, bound)

    out_ref, attn_ref = attention_reference(output, context, weight, bias)
    out_ref = jax.block_until_ready(out_ref)

    # 1) Higher-precision path: f32 MXU operands, exact reciprocal, f32 attn.
    out_f32, attn_f32 = attention_forward(
        output, context, weight, bias,
        mxu_dtype=jnp.float32, approx_softmax=False)
    out_f32 = jax.block_until_ready(out_f32)
    attn_f32 = jax.block_until_ready(attn_f32)
    # Attention rows must renormalize to ~1 (also validates Lk-padding mask).
    row_sums = jnp.sum(attn_f32, axis=-1)
    assert jnp.allclose(row_sums, 1.0, atol=1e-3), row_sums
    err_o = float(jnp.max(jnp.abs(out_f32 - out_ref)))
    err_a = float(jnp.max(jnp.abs(attn_f32 - attn_ref)))
    # Tolerance covers possible multi-pass f32 decomposition on the MXU.
    assert err_o < 5e-2, err_o
    assert err_a < 5e-2, err_a

    # 2) Fast path (default): bf16 MXU operands, bf16 attn output, approximate
    #    reciprocal -> loose sanity tolerances vs. the f32 reference.
    out_bf, attn_bf = attention_forward(output, context, weight, bias)
    out_bf = jax.block_until_ready(out_bf)
    attn_bf = jax.block_until_ready(attn_bf)
    assert jnp.allclose(out_bf.astype(jnp.float32), out_ref, atol=1e-1, rtol=0)
    assert jnp.allclose(attn_bf.astype(jnp.float32), attn_ref, atol=1e-1, rtol=0)

    print("KERNEL_OK")
</pallas_src>

<mosaic_0001>
module attributes {stable_mosaic.version = 11 : i64} {
  func.func @_attention_kernel(%arg0: i32, %arg1: i32, %arg2: memref<1x8x128xf32, #tpu.memory_space<vmem>>, %arg3: memref<1x128x128xf32, #tpu.memory_space<vmem>>, %arg4: memref<128x128xf32, #tpu.memory_space<vmem>>, %arg5: memref<128x128xf32, #tpu.memory_space<vmem>>, %arg6: memref<1x128xf32, #tpu.memory_space<vmem>>, %arg7: memref<1x1x128xf32, #tpu.memory_space<vmem>>, %arg8: memref<1x8x128xf32, #tpu.memory_space<vmem>>, %arg9: memref<1x8x128xf32, #tpu.memory_space<vmem>>) attributes {dimension_semantics = [#tpu.dimension_semantics<parallel>, #tpu.dimension_semantics<parallel>], iteration_bounds = array<i64: 2, 1>, scalar_prefetch = 0 : i64, scratch_operands = 0 : i64, tpu.core_type = #tpu.core_type<tc>, window_params = [{transform_indices = @transform_0, window_bounds = array<i64: 1, 8, 128>}, {transform_indices = @transform_1, window_bounds = array<i64: 1, 128, 128>}, {pipeline_mode = #tpu.pipeline_mode<synchronous>, transform_indices = @transform_2, window_bounds = array<i64: 128, 128>}, {pipeline_mode = #tpu.pipeline_mode<synchronous>, transform_indices = @transform_3, window_bounds = array<i64: 128, 128>}, {pipeline_mode = #tpu.pipeline_mode<synchronous>, transform_indices = @transform_4, window_bounds = array<i64: 1, 128>}, {pipeline_mode = #tpu.pipeline_mode<synchronous>, transform_indices = @transform_5, window_bounds = array<i64: 1, 1, 128>}, {transform_indices = @transform_6, window_bounds = array<i64: 1, 8, 128>}, {transform_indices = @transform_7, window_bounds = array<i64: 1, 8, 128>}]} {
    %c0 = arith.constant 0 : index
    %c0_0 = arith.constant 0 : index
    %c0_1 = arith.constant 0 : index
    %0 = vector.load %arg2[%c0, %c0_0, %c0_1] : memref<1x8x128xf32, #tpu.memory_space<vmem>>, vector<1x8x128xf32>
    %c0_2 = arith.constant 0 : index
    %c0_3 = arith.constant 0 : index
    %c0_4 = arith.constant 0 : index
    %1 = vector.load %arg3[%c0_2, %c0_3, %c0_4] : memref<1x128x128xf32, #tpu.memory_space<vmem>>, vector<1x128x128xf32>
    %cst = arith.constant dense<0.000000e+00> : vector<1x8x128xf32>
    %2 = tpu.matmul %0, %1, %cst {dimension_numbers = #tpu.dot_dimension_numbers<[2], [2], [1], [1], [0, 0, 0, 1, 1, 1], [0], [0]>} : vector<1x8x128xf32>, vector<1x128x128xf32>, vector<1x8x128xf32> -> vector<1x8x128xf32>
    %c0_5 = arith.constant 0 : index
    %c0_6 = arith.constant 0 : index
    %c0_7 = arith.constant 0 : index
    %3 = vector.load %arg7[%c0_5, %c0_6, %c0_7] : memref<1x1x128xf32, #tpu.memory_space<vmem>>, vector<1x1x128xf32>
    %4 = vector.broadcast %3 : vector<1x1x128xf32> to vector<1x8x128xf32>
    %5 = arith.addf %2, %4 : vector<1x8x128xf32>
    %cst_8 = arith.constant dense<0xFF800000> : vector<1x8xf32>
    %6 = vector.multi_reduction <maximumf>, %5, %cst_8 [2] : vector<1x8x128xf32> to vector<1x8xf32>
    %7 = vector.shape_cast %6 : vector<1x8xf32> to vector<1x8x1xf32>
    %8 = vector.broadcast %7 : vector<1x8x1xf32> to vector<1x8x128xf32>
    %9 = arith.subf %5, %8 : vector<1x8x128xf32>
    %10 = math.exp %9 : vector<1x8x128xf32>
    %cst_9 = arith.constant dense<0.000000e+00> : vector<1x8xf32>
    %11 = vector.multi_reduction <add>, %10, %cst_9 [2] : vector<1x8x128xf32> to vector<1x8xf32>
    %12 = vector.shape_cast %11 : vector<1x8xf32> to vector<1x8x1xf32>
    %13 = tpu.reciprocal %12 : vector<1x8x1xf32> -> vector<1x8x1xf32>
    %14 = vector.broadcast %13 : vector<1x8x1xf32> to vector<1x8x128xf32>
    %15 = arith.mulf %10, %14 : vector<1x8x128xf32>
    %c0_10 = arith.constant 0 : index
    %c0_11 = arith.constant 0 : index
    %c0_12 = arith.constant 0 : index
    %16 = vector.load %arg9[%c0_10, %c0_11, %c0_12] : memref<1x8x128xf32, #tpu.memory_space<vmem>>, vector<1x8x128xf32>
    tpu.vector_store %arg9[%c0_10, %c0_11, %c0_12], %15 {strides = array<i32>} : memref<1x8x128xf32, #tpu.memory_space<vmem>>, vector<1x8x128xf32>,
    %cst_13 = arith.constant dense<0.000000e+00> : vector<1x8x128xf32>
    %17 = tpu.matmul %15, %1, %cst_13 {dimension_numbers = #tpu.dot_dimension_numbers<[2], [1], [1], [2], [0, 0, 0, 1, 1, 2], [0], [0]>} : vector<1x8x128xf32>, vector<1x128x128xf32>, vector<1x8x128xf32> -> vector<1x8x128xf32>
    %18 = vector.shape_cast %17 : vector<1x8x128xf32> to vector<8x128xf32>
    %19 = vector.shape_cast %0 : vector<1x8x128xf32> to vector<8x128xf32>
    %c0_14 = arith.constant 0 : index
    %c0_15 = arith.constant 0 : index
    %20 = vector.load %arg4[%c0_14, %c0_15] : memref<128x128xf32, #tpu.memory_space<vmem>>, vector<128x128xf32>
    %cst_16 = arith.constant dense<0.000000e+00> : vector<8x128xf32>
    %21 = tpu.matmul %18, %20, %cst_16 {dimension_numbers = #tpu.dot_dimension_numbers<[1], [0], [0], [1], [0, 0, 1, 1], [], []>} : vector<8x128xf32>, vector<128x128xf32>, vector<8x128xf32> -> vector<8x128xf32>
    %c0_17 = arith.constant 0 : index
    %c0_18 = arith.constant 0 : index
    %22 = vector.load %arg5[%c0_17, %c0_18] : memref<128x128xf32, #tpu.memory_space<vmem>>, vector<128x128xf32>
    %cst_19 = arith.constant dense<0.000000e+00> : vector<8x128xf32>
    %23 = tpu.matmul %19, %22, %cst_19 {dimension_numbers = #tpu.dot_dimension_numbers<[1], [0], [0], [1], [0, 0, 1, 1], [], []>} : vector<8x128xf32>, vector<128x128xf32>, vector<8x128xf32> -> vector<8x128xf32>
    %24 = arith.addf %21, %23 : vector<8x128xf32>
    %c0_20 = arith.constant 0 : index
    %c0_21 = arith.constant 0 : index
    %25 = vector.load %arg6[%c0_20, %c0_21] : memref<1x128xf32, #tpu.memory_space<vmem>>, vector<1x128xf32>
    %26 = vector.broadcast %25 : vector<1x128xf32> to vector<8x128xf32>
    %27 = arith.addf %24, %26 : vector<8x128xf32>
    %28 = math.tanh %27 : vector<8x128xf32>
    %29 = vector.shape_cast %28 : vector<8x128xf32> to vector<1x8x128xf32>
    %c0_22 = arith.constant 0 : index
    %c0_23 = arith.constant 0 : index
    %c0_24 = arith.constant 0 : index
    %30 = vector.load %arg8[%c0_22, %c0_23, %c0_24] : memref<1x8x128xf32, #tpu.memory_space<vmem>>, vector<1x8x128xf32>
    tpu.vector_store %arg8[%c0_22, %c0_23, %c0_24], %29 {strides = array<i32>} : memref<1x8x128xf32, #tpu.memory_space<vmem>>, vector<1x8x128xf32>,
    return
  }
  func.func @transform_0(%arg0: i32, %arg1: i32) -> (i32, i32, i32) {
    %c0_i32 = arith.constant 0 : i32
    %c0_i32_0 = arith.constant 0 : i32
    return %arg0, %arg1, %c0_i32 : i32, i32, i32
  }
  func.func @transform_1(%arg0: i32, %arg1: i32) -> (i32, i32, i32) {
    %c0_i32 = arith.constant 0 : i32
    %c0_i32_0 = arith.constant 0 : i32
    %c0_i32_1 = arith.constant 0 : i32
    return %arg0, %c0_i32, %c0_i32_0 : i32, i32, i32
  }
  func.func @transform_2(%arg0: i32, %arg1: i32) -> (i32, i32) {
    %c0_i32 = arith.constant 0 : i32
    %c0_i32_0 = arith.constant 0 : i32
    %c0_i32_1 = arith.constant 0 : i32
    return %c0_i32, %c0_i32_0 : i32, i32
  }
  func.func @transform_3(%arg0: i32, %arg1: i32) -> (i32, i32) {
    %c0_i32 = arith.constant 0 : i32
    %c0_i32_0 = arith.constant 0 : i32
    %c0_i32_1 = arith.constant 0 : i32
    return %c0_i32, %c0_i32_0 : i32, i32
  }
  func.func @transform_4(%arg0: i32, %arg1: i32) -> (i32, i32) {
    %c0_i32 = arith.constant 0 : i32
    %c0_i32_0 = arith.constant 0 : i32
    %c0_i32_1 = arith.constant 0 : i32
    return %c0_i32, %c0_i32_0 : i32, i32
  }
  func.func @transform_5(%arg0: i32, %arg1: i32) -> (i32, i32, i32) {
    %c0_i32 = arith.constant 0 : i32
    %c0_i32_0 = arith.constant 0 : i32
    %c0_i32_1 = arith.constant 0 : i32
    %c0_i32_2 = arith.constant 0 : i32
    return %c0_i32, %c0_i32_0, %c0_i32_1 : i32, i32, i32
  }
  func.func @transform_6(%arg0: i32, %arg1: i32) -> (i32, i32, i32) {
    %c0_i32 = arith.constant 0 : i32
    %c0_i32_0 = arith.constant 0 : i32
    return %arg0, %arg1, %c0_i32 : i32, i32, i32
  }
  func.func @transform_7(%arg0: i32, %arg1: i32) -> (i32, i32, i32) {
    %c0_i32 = arith.constant 0 : i32
    %c0_i32_0 = arith.constant 0 : i32
    return %arg0, %arg1, %c0_i32 : i32, i32, i32
  }
}

</mosaic_0001>

<llo_original>
// kernel: tpu_custom_call.1
$region0: #{tpu_custom_call.1}
  #allocation0 [shape = 'u32[]', space=smem, size = 0x4, offset = 0x4, fixed_abs, tag = 'smem constant byte address 0x4 - core index']
  #allocation1 [shape = 'u32[144,128]{1,0:T(1,128)}', space=vmem, size = 0x12000, scoped, tag = 'internal scratch']
  %s0 = inlined_call_operand.hbm [shape: f32[2,8,128], index: 0, kind: input, shape index: {}]
  %s1 = inlined_call_operand.hbm [shape: f32[2,128,128], index: 1, kind: input, shape index: {}]
  %s2 = inlined_call_operand.hbm [shape: f32[128,128], index: 2, kind: input, shape index: {}]
  %s3 = inlined_call_operand.hbm [shape: f32[128,128], index: 3, kind: input, shape index: {}]
  %s4 = inlined_call_operand.vmem [shape: f32[1,128], index: 4, kind: input, shape index: {}]
  %s5 = inlined_call_operand.vmem [shape: f32[1,1,128], index: 5, kind: input, shape index: {}]
  %s6 = inlined_call_operand.hbm [shape: f32[2,8,128], index: 6, kind: output, shape index: {0}]
  %s7 = inlined_call_operand.hbm [shape: f32[2,8,128], index: 7, kind: output, shape index: {1}]
  %8 = xla_tuple %s6, %s7
  %s9 = sld [smem:[#allocation0]]
  $region81: #{tpu_custom_call.1} parent=0
    _
  %s11 = ssub.s32 1, %s9
  %s12 = scalar_select 0, %s11, %s9
  $region1: #{tpu_custom_call.1} parent=0
    #allocation2 [shape = 'u8[8192]{0}', space=vmem, size = 0x2000, scoped, tag = 'input window, operand 0']
    #allocation3 [shape = 's32[2]{0}', space=sflag, size = 0x8, scoped, tag = 'scoped memory for tpu_custom_call.1']
    #allocation4 [shape = 's32[2]{0}', space=sflag, size = 0x8, scoped, tag = 'scoped memory for tpu_custom_call.1']
    #allocation5 [shape = 'u8[131072]{0}', space=vmem, size = 0x20000, scoped, tag = 'input window, operand 1']
    #allocation6 [shape = 's32[2]{0}', space=sflag, size = 0x8, scoped, tag = 'scoped memory for tpu_custom_call.1']
    #allocation7 [shape = 'u8[65536]{0}', space=vmem, size = 0x10000, scoped, tag = 'input window, operand 2, single buffered']
    #allocation8 [shape = 'u8[65536]{0}', space=vmem, size = 0x10000, scoped, tag = 'input window, operand 3, single buffered']
    #allocation9 [shape = 's32[1]{0}', space=sflag, size = 0x4, scoped, tag = 'scoped memory for tpu_custom_call.1']
    #allocation10 [shape = 'u8[8192]{0}', space=vmem, size = 0x2000, scoped, tag = 'output window, operand 0']
    #allocation11 [shape = 'u8[8192]{0}', space=vmem, size = 0x2000, scoped, tag = 'output window, operand 1']
    #allocation12 [shape = 's32[2]{0}', space=sflag, size = 0x8, scoped, tag = 'scoped memory for tpu_custom_call.1']
    %13 = vsyncpa [#allocation3], 0
    %s14 = scalar_lea.sflag [#allocation3], 1
    %15 = vsyncpa %s14, 0
    %16 = vsyncpa [#allocation6], 0
    %s17 = scalar_lea.sflag [#allocation6], 1
    %18 = vsyncpa %s17, 0
    %19 = vsyncpa [#allocation9], 0
    %20 = vsyncpa [#allocation4], 0
    %s21 = scalar_lea.sflag [#allocation4], 1
    %22 = vsyncpa %s21, 0
    %23 = vsyncpa [#allocation12], 0
    %s24 = scalar_lea.sflag [#allocation12], 1
    %25 = vsyncpa %s24, 0
    loop: start=0, step=1, limit=4
    $region2: #{tpu_custom_call.1} parent=1 // loop_pre_header
      _
    $region3: #{tpu_custom_call.1} parent=1 // loop_header
      %s27 = sphi 0, %s31
      %p28 = scmp.ge.s32.totalorder %s27, 4
      %s34 = sphi 0, %s46
      %s35 = sphi 0, %s42
      %s36 = sphi 0, %s34
      %s37 = sphi 0, %s35
      %s38 = sphi 0, %s36
      %s39 = sphi 0, %s37
      %s51 = sphi 0, %s53
      %s54 = sphi 0, %s51
      %s55 = sphi 0, %s54
      %s71 = sphi 0, %s55
      %s77 = sphi 0, %s79
      %s80 = sphi 0, %s77
      %s81 = sphi 0, %s80
      %s97 = sphi 0, %s81
      %s101 = sphi 0, %s101
      %s103 = sphi 0, %s101
      %s104 = sphi 0, %s103
      %s118 = sphi 0, %s104
      %s122 = sphi 0, %s122
      %s124 = sphi 0, %s122
      %s125 = sphi 0, %s124
      %s139 = sphi 0, %s125
      %s143 = sphi 0, %s143
      %s145 = sphi 0, %s143
      %s146 = sphi 0, %s145
      %s160 = sphi 0, %s146
      %s164 = sphi 0, %s164
      %s166 = sphi 0, %s164
      %s167 = sphi 0, %s166
      %s181 = sphi 0, %s167
      %s189 = sphi 0, %s191
      %s192 = sphi 0, %s189
      %s193 = sphi 0, %s192
      %s209 = sphi 0, %s193
      %s217 = sphi 0, %s219
      %s220 = sphi 0, %s217
      %s221 = sphi 0, %s220
      %s237 = sphi 0, %s221
    $region4: #{tpu_custom_call.1} parent=1 // loop_header_branch
      %30 = sbr.rel (%p28) target = $region8
    $region5: #{tpu_custom_call.1} parent=1 // loop_body
      %s32 = ssub.s32 %s27, 1
      %s33 = ssub.s32 %s27, 2
      %s40 = sadd.s32 1, %s35
      %p41 = scmp.ge.s32.totalorder %s40, 1
      %s42 = scalar_select %p41, 0, %s40
      %s43 = sadd.s32 1, %s34
      %s44 = scalar_select %p41, %s43, %s34
      %p45 = scmp.ge.s32.totalorder %s44, 2
      %s46 = scalar_select %p45, 0, %s44
      %s47 = ssub.s32 %s34, %s46
      %s48 = ssub.s32 %s35, %s42
      %s49 = sor.u32 %s47, %s48
      %p50 = scmp.eq.s32.totalorder %s49, 0
      %s52 = sadd.s32 %s51, 1
      %s53 = scalar_select %p50, %s51, %s52
      %p56 = pneg %p50
      %p57 = scmp.eq.s32.totalorder %s27, 1
      %p58 = por %p56, %p57
      %p59 = scmp.ne.s32.totalorder %s51, %s54
      %p60 = scmp.eq.s32.totalorder %s27, 0
      %p61 = por %p59, %p60
      %p62 = scmp.ne.s32.totalorder %s51, %s54
      %p63 = scmp.eq.s32.totalorder %s32, 1
      %p64 = por %p62, %p63
      %p65 = scmp.ne.s32.totalorder %s54, %s55
      %p66 = scmp.eq.s32.totalorder %s32, 0
      %p67 = por %p65, %p66
      %p68 = scmp.ne.s32.totalorder %s54, %s55
      %p69 = scmp.eq.s32.totalorder %s33, 1
      %p70 = por %p68, %p69
      %p72 = scmp.ne.s32.totalorder %s55, %s71
      %p73 = scmp.eq.s32.totalorder %s33, 0
      %p74 = por %p72, %p73
      %s75 = ssub.s32 %s34, %s46
      %p76 = scmp.eq.s32.totalorder %s75, 0
      %s78 = sadd.s32 %s77, 1
      %s79 = scalar_select %p76, %s77, %s78
      %p82 = pneg %p76
      %p83 = scmp.eq.s32.totalorder %s27, 1
      %p84 = por %p82, %p83
      %p85 = scmp.ne.s32.totalorder %s77, %s80
      %p86 = scmp.eq.s32.totalorder %s27, 0
      %p87 = por %p85, %p86
      %p88 = scmp.ne.s32.totalorder %s77, %s80
      %p89 = scmp.eq.s32.totalorder %s32, 1
      %p90 = por %p88, %p89
      %p91 = scmp.ne.s32.totalorder %s80, %s81
      %p92 = scmp.eq.s32.totalorder %s32, 0
      %p93 = por %p91, %p92
      %p94 = scmp.ne.s32.totalorder %s80, %s81
      %p95 = scmp.eq.s32.totalorder %s33, 1
      %p96 = por %p94, %p95
      %p98 = scmp.ne.s32.totalorder %s81, %s97
      %p99 = scmp.eq.s32.totalorder %s33, 0
      %p100 = por %p98, %p99
      %s102 = sadd.s32 %s101, 1
      %p105 = scmp.eq.s32.totalorder %s27, 1
      %p106 = scmp.ne.s32.totalorder %s101, %s103
      %p107 = scmp.eq.s32.totalorder %s27, 0
      %p108 = por %p106, %p107
      %p109 = scmp.ne.s32.totalorder %s101, %s103
      %p110 = scmp.eq.s32.totalorder %s32, 1
      %p111 = por %p109, %p110
      %p112 = scmp.ne.s32.totalorder %s103, %s104
      %p113 = scmp.eq.s32.totalorder %s32, 0
      %p114 = por %p112, %p113
      %p115 = scmp.ne.s32.totalorder %s103, %s104
      %p116 = scmp.eq.s32.totalorder %s33, 1
      %p117 = por %p115, %p116
      %p119 = scmp.ne.s32.totalorder %s104, %s118
      %p120 = scmp.eq.s32.totalorder %s33, 0
      %p121 = por %p119, %p120
      %s123 = sadd.s32 %s122, 1
      %p126 = scmp.eq.s32.totalorder %s27, 1
      %p127 = scmp.ne.s32.totalorder %s122, %s124
      %p128 = scmp.eq.s32.totalorder %s27, 0
      %p129 = por %p127, %p128
      %p130 = scmp.ne.s32.totalorder %s122, %s124
      %p131 = scmp.eq.s32.totalorder %s32, 1
      %p132 = por %p130, %p131
      %p133 = scmp.ne.s32.totalorder %s124, %s125
      %p134 = scmp.eq.s32.totalorder %s32, 0
      %p135 = por %p133, %p134
      %p136 = scmp.ne.s32.totalorder %s124, %s125
      %p137 = scmp.eq.s32.totalorder %s33, 1
      %p138 = por %p136, %p137
      %p140 = scmp.ne.s32.totalorder %s125, %s139
      %p141 = scmp.eq.s32.totalorder %s33, 0
      %p142 = por %p140, %p141
      %s144 = sadd.s32 %s143, 1
      %p147 = scmp.eq.s32.totalorder %s27, 1
      %p148 = scmp.ne.s32.totalorder %s143, %s145
      %p149 = scmp.eq.s32.totalorder %s27, 0
      %p150 = por %p148, %p149
      %p151 = scmp.ne.s32.totalorder %s143, %s145
      %p152 = scmp.eq.s32.totalorder %s32, 1
      %p153 = por %p151, %p152
      %p154 = scmp.ne.s32.totalorder %s145, %s146
      %p155 = scmp.eq.s32.totalorder %s32, 0
      %p156 = por %p154, %p155
      %p157 = scmp.ne.s32.totalorder %s145, %s146
      %p158 = scmp.eq.s32.totalorder %s33, 1
      %p159 = por %p157, %p158
      %p161 = scmp.ne.s32.totalorder %s146, %s160
      %p162 = scmp.eq.s32.totalorder %s33, 0
      %p163 = por %p161, %p162
      %s165 = sadd.s32 %s164, 1
      %p168 = scmp.eq.s32.totalorder %s27, 1
      %p169 = scmp.ne.s32.totalorder %s164, %s166
      %p170 = scmp.eq.s32.totalorder %s27, 0
      %p171 = por %p169, %p170
      %p172 = scmp.ne.s32.totalorder %s164, %s166
      %p173 = scmp.eq.s32.totalorder %s32, 1
      %p174 = por %p172, %p173
      %p175 = scmp.ne.s32.totalorder %s166, %s167
      %p176 = scmp.eq.s32.totalorder %s32, 0
      %p177 = por %p175, %p176
      %p178 = scmp.ne.s32.totalorder %s166, %s167
      %p179 = scmp.eq.s32.totalorder %s33, 1
      %p180 = por %p178, %p179
      %p182 = scmp.ne.s32.totalorder %s167, %s181
      %p183 = scmp.eq.s32.totalorder %s33, 0
      %p184 = por %p182, %p183
      %s185 = ssub.s32 %s34, %s46
      %s186 = ssub.s32 %s35, %s42
      %s187 = sor.u32 %s185, %s186
      %p188 = scmp.eq.s32.totalorder %s187, 0
      %s190 = sadd.s32 %s189, 1
      %s191 = scalar_select %p188, %s189, %s190
      %p194 = pneg %p188
      %p195 = scmp.eq.s32.totalorder %s27, 1
      %p196 = por %p194, %p195
      %p197 = scmp.ne.s32.totalorder %s189, %s192
      %p198 = scmp.eq.s32.totalorder %s27, 0
      %p199 = por %p197, %p198
      %p200 = scmp.ne.s32.totalorder %s189, %s192
      %p201 = scmp.eq.s32.totalorder %s32, 1
      %p202 = por %p200, %p201
      %p203 = scmp.ne.s32.totalorder %s192, %s193
      %p204 = scmp.eq.s32.totalorder %s32, 0
      %p205 = por %p203, %p204
      %p206 = scmp.ne.s32.totalorder %s192, %s193
      %p207 = scmp.eq.s32.totalorder %s33, 1
      %p208 = por %p206, %p207
      %p210 = scmp.ne.s32.totalorder %s193, %s209
      %p211 = scmp.eq.s32.totalorder %s33, 0
      %p212 = por %p210, %p211
      %s213 = ssub.s32 %s34, %s46
      %s214 = ssub.s32 %s35, %s42
      %s215 = sor.u32 %s213, %s214
      %p216 = scmp.eq.s32.totalorder %s215, 0
      %s218 = sadd.s32 %s217, 1
      %s219 = scalar_select %p216, %s217, %s218
      %p222 = pneg %p216
      %p223 = scmp.eq.s32.totalorder %s27, 1
      %p224 = por %p222, %p223
      %p225 = scmp.ne.s32.totalorder %s217, %s220
      %p226 = scmp.eq.s32.totalorder %s27, 0
      %p227 = por %p225, %p226
      %p228 = scmp.ne.s32.totalorder %s217, %s220
      %p229 = scmp.eq.s32.totalorder %s32, 1
      %p230 = por %p228, %p229
      %p231 = scmp.ne.s32.totalorder %s220, %s221
      %p232 = scmp.eq.s32.totalorder %s32, 0
      %p233 = por %p231, %p232
      %p234 = scmp.ne.s32.totalorder %s220, %s221
      %p235 = scmp.eq.s32.totalorder %s33, 1
      %p236 = por %p234, %p235
      %p238 = scmp.ne.s32.totalorder %s221, %s237
      %p239 = scmp.eq.s32.totalorder %s33, 0
      %p240 = por %p238, %p239
      %p241 = scmp.le.s32.totalorder 1, %s27
      %p242 = scmp.lt.s32.totalorder %s27, 3
      %p243 = pnand %p241, %p242
      %p244 = pneg %p243
      // Predicated region
      $region9: #{tpu_custom_call.1} parent=5 // pred_check
        _
      $region10: #{tpu_custom_call.1} parent=5 // pred_check_branch
        %246 = sbr.rel (%p243) target = $region12
      $region11: #{tpu_custom_call.1} parent=5 // pred_region
        %s247 = ssub.s32 %s27, 1
        // Predicated region
        $region13: #{tpu_custom_call.1} parent=11 // pred_check
          %p248 = pneg %p114
        $region14: #{tpu_custom_call.1} parent=11 // pred_check_branch
          %250 = sbr.rel (%p248) target = $region16
        $region15: #{tpu_custom_call.1} parent=11 // pred_region
          %s252 = ssub.s32 2048, 2048
          %253 = vsyncadd [#allocation6], %s252
          %s254 = sshll.u32 [#allocation7], 4
          %s255 = int_to_ptr.vmem [resolvable:$true] %s254
          %260 = dma.hbm_to_vmem [thread:$0]  %s2, 2048, %s255, [#allocation6], 128, 128, 8
        $region16: #{tpu_custom_call.1} parent=11 // pred_fallthru
          _
        // Predicated region
        $region17: #{tpu_custom_call.1} parent=11 // pred_check
          %p261 = pneg %p135
        $region18: #{tpu_custom_call.1} parent=11 // pred_check_branch
          %263 = sbr.rel (%p261) target = $region20
        $region19: #{tpu_custom_call.1} parent=11 // pred_region
          %s265 = ssub.s32 2048, 2048
          %266 = vsyncadd [#allocation9], %s265
          %s267 = sshll.u32 [#allocation8], 4
          %s268 = int_to_ptr.vmem [resolvable:$true] %s267
          %273 = dma.hbm_to_vmem [thread:$0]  %s3, 2048, %s268, [#allocation9], 128, 128, 8
        $region20: #{tpu_custom_call.1} parent=11 // pred_fallthru
          _
        // Predicated region
        $region21: #{tpu_custom_call.1} parent=11 // pred_check
          %p274 = pneg %p156
        $region22: #{tpu_custom_call.1} parent=11 // pred_check_branch
          %276 = sbr.rel (%p274) target = $region24
        $region23: #{tpu_custom_call.1} parent=11 // pred_region
          _
        $region24: #{tpu_custom_call.1} parent=11 // pred_fallthru
          _
        // Predicated region
        $region25: #{tpu_custom_call.1} parent=11 // pred_check
          %p277 = pneg %p177
        $region26: #{tpu_custom_call.1} parent=11 // pred_check_branch
          %279 = sbr.rel (%p277) target = $region28
        $region27: #{tpu_custom_call.1} parent=11 // pred_region
          _
        $region28: #{tpu_custom_call.1} parent=11 // pred_fallthru
          _
      $region12: #{tpu_custom_call.1} parent=5 // pred_fallthru
        _
      %p280 = scmp.lt.s32.totalorder %s27, 2
      // Predicated region
      $region29: #{tpu_custom_call.1} parent=5 // pred_check
        %p281 = pneg %p280
      $region30: #{tpu_custom_call.1} parent=5 // pred_check_branch
        %283 = sbr.rel (%p281) target = $region32
      $region31: #{tpu_custom_call.1} parent=5 // pred_region
        // Predicated region
        $region33: #{tpu_custom_call.1} parent=31 // pred_check
          %p284 = pneg %p61
        $region34: #{tpu_custom_call.1} parent=31 // pred_check_branch
          %286 = sbr.rel (%p284) target = $region36
        $region35: #{tpu_custom_call.1} parent=31 // pred_region
          %s287 = sand.u32 %s51, 1
          %s288 = scalar_lea.sflag [#allocation3], %s287
          %s289 = sand.u32 %s51, 1
          %s290 = smul.addr %s289, 8
          %s291 = scalar_lea.vmem [#allocation2], %s290
          %s293 = ssub.s32 128, 128
          %294 = vsyncadd %s288, %s293
          %s295 = sadd.s32 %s35, %s34
          %s296 = smul.addr %s295, 128
          %s297 = scalar_lea.hbm %s0, %s296
          %s299 = sshll.u32 %s291, 4
          %s300 = int_to_ptr.vmem [resolvable:$true] %s299
          %302 = dma.hbm_to_vmem [thread:$0]  %s297, 128, %s300, %s288
        $region36: #{tpu_custom_call.1} parent=31 // pred_fallthru
          _
        // Predicated region
        $region37: #{tpu_custom_call.1} parent=31 // pred_check
          %p303 = pneg %p87
        $region38: #{tpu_custom_call.1} parent=31 // pred_check_branch
          %305 = sbr.rel (%p303) target = $region40
        $region39: #{tpu_custom_call.1} parent=31 // pred_region
          %s306 = sand.u32 %s27, 1
          %s307 = scalar_lea.sflag [#allocation6], %s306
          %s308 = sand.u32 %s77, 1
          %s309 = smul.addr %s308, 128
          %s310 = scalar_lea.vmem [#allocation5], %s309
          %s312 = ssub.s32 2048, 2048
          %313 = vsyncadd %s307, %s312
          %s314 = smul.addr %s34, 16
          %s315 = smul.addr %s314, 128
          %s316 = scalar_lea.hbm %s1, %s315
          %s317 = sshll.u32 %s310, 4
          %s318 = int_to_ptr.vmem [resolvable:$true] %s317
          %323 = dma.hbm_to_vmem [thread:$0]  %s316, 2048, %s318, %s307, 128, 128, 8
        $region40: #{tpu_custom_call.1} parent=31 // pred_fallthru
          _
      $region32: #{tpu_custom_call.1} parent=5 // pred_fallthru
        _
      %p324 = scmp.le.s32.totalorder 1, %s27
      %p325 = scmp.lt.s32.totalorder %s27, 3
      %p326 = pnand %p324, %p325
      %p327 = pneg %p326
      // Predicated region
      $region41: #{tpu_custom_call.1} parent=5 // pred_check
        _
      $region42: #{tpu_custom_call.1} parent=5 // pred_check_branch
        %329 = sbr.rel (%p326) target = $region44
      $region43: #{tpu_custom_call.1} parent=5 // pred_region
        %s330 = ssub.s32 %s27, 1
        %s331 = sand.u32 %s54, 1
        %s332 = scalar_lea.sflag [#allocation3], %s331
        %s333 = sand.u32 %s54, 1
        %s334 = smul.addr %s333, 8
        %s335 = scalar_lea.vmem [#allocation2], %s334
        // Predicated region
        $region45: #{tpu_custom_call.1} parent=43 // pred_check
          %p336 = pneg %p67
        $region46: #{tpu_custom_call.1} parent=43 // pred_check_branch
          %338 = sbr.rel (%p336) target = $region48
        $region47: #{tpu_custom_call.1} parent=43 // pred_region
          %339 = dma.done %s332, 128
        $region48: #{tpu_custom_call.1} parent=43 // pred_fallthru
          _
        %s340 = sand.u32 %s32, 1
        %s341 = scalar_lea.sflag [#allocation6], %s340
        %s342 = sand.u32 %s80, 1
        %s343 = smul.addr %s342, 128
        %s344 = scalar_lea.vmem [#allocation5], %s343
        // Predicated region
        $region49: #{tpu_custom_call.1} parent=43 // pred_check
          %p345 = pneg %p93
        $region50: #{tpu_custom_call.1} parent=43 // pred_check_branch
          %347 = sbr.rel (%p345) target = $region52
        $region51: #{tpu_custom_call.1} parent=43 // pred_region
          %348 = dma.done %s341, 2048
        $region52: #{tpu_custom_call.1} parent=43 // pred_fallthru
          _
        // Predicated region
        $region53: #{tpu_custom_call.1} parent=43 // pred_check
          %p349 = pneg %p114
        $region54: #{tpu_custom_call.1} parent=43 // pred_check_branch
          %351 = sbr.rel (%p349) target = $region56
        $region55: #{tpu_custom_call.1} parent=43 // pred_region
          %352 = dma.done [#allocation6], 2048
        $region56: #{tpu_custom_call.1} parent=43 // pred_fallthru
          _
        // Predicated region
        $region57: #{tpu_custom_call.1} parent=43 // pred_check
          %p353 = pneg %p135
        $region58: #{tpu_custom_call.1} parent=43 // pred_check_branch
          %355 = sbr.rel (%p353) target = $region60
        $region59: #{tpu_custom_call.1} parent=43 // pred_region
          %356 = dma.done [#allocation9], 2048
        $region60: #{tpu_custom_call.1} parent=43 // pred_fallthru
          _
        %s357 = sand.u32 %s54, 1
        %s358 = scalar_lea.sflag [#allocation3], %s357
        %s359 = sand.u32 %s54, 1
        %s360 = smul.addr %s359, 8
        %s361 = scalar_lea.vmem [#allocation2], %s360
        %p362 = pneg %p67
        %p363 = pneg %p64
        %s364 = sand.u32 %s32, 1
        %s365 = scalar_lea.sflag [#allocation6], %s364
        %s366 = sand.u32 %s80, 1
        %s367 = smul.addr %s366, 128
        %s368 = scalar_lea.vmem [#allocation5], %s367
        %p369 = pneg %p93
        %p370 = pneg %p90
        %p371 = pneg %p114
        %p372 = pneg %p111
        %p373 = pneg %p135
        %p374 = pneg %p132
        %p375 = pneg %p156
        %p376 = pneg %p153
        %p377 = pneg %p177
        %p378 = pneg %p174
        %p379 = pneg %p205
        %p380 = pneg %p202
        %s381 = sand.u32 %s192, 1
        %s382 = scalar_lea.sflag [#allocation4], %s381
        %s383 = sand.u32 %s192, 1
        %s384 = smul.addr %s383, 8
        %s385 = scalar_lea.vmem [#allocation10], %s384
        %p386 = pneg %p233
        %p387 = pneg %p230
        %s388 = sand.u32 %s220, 1
        %s389 = scalar_lea.sflag [#allocation12], %s388
        %s390 = sand.u32 %s220, 1
        %s391 = smul.addr %s390, 8
        %s392 = scalar_lea.vmem [#allocation11], %s391
        %v393 = vld [vmem:[%s335] sm:$0xff]
        %v394 = vld [vmem:[%s344] sm:$0xff]
        %v395 = vld [vmem:[%s344 + $0x8] sm:$0xff]
        %v396 = vld [vmem:[%s344 + $0x10] sm:$0xff]
        %v397 = vld [vmem:[%s344 + $0x18] sm:$0xff]
        %v398 = vld [vmem:[%s344 + $0x20] sm:$0xff]
        %v399 = vld [vmem:[%s344 + $0x28] sm:$0xff]
        %v400 = vld [vmem:[%s344 + $0x30] sm:$0xff]
        %v401 = vld [vmem:[%s344 + $0x38] sm:$0xff]
        %v402 = vld [vmem:[%s344 + $0x40] sm:$0xff]
        %v403 = vld [vmem:[%s344 + $0x48] sm:$0xff]
        %v404 = vld [vmem:[%s344 + $0x50] sm:$0xff]
        %v405 = vld [vmem:[%s344 + $0x58] sm:$0xff]
        %v406 = vld [vmem:[%s344 + $0x60] sm:$0xff]
        %v407 = vld [vmem:[%s344 + $0x68] sm:$0xff]
        %v408 = vld [vmem:[%s344 + $0x70] sm:$0xff]
        %v409 = vld [vmem:[%s344 + $0x78] sm:$0xff]
        %v410 = vld [vmem:[%s5] sm:$0x1]
        %v412 = vlaneseq
        %v413 = vshrl.u32 %v412, 7
        %v414 = vsub.s32 0, %v413
        %v415 = vrot.slane %v410, %v414
        %417 = vmatprep.subr.mxu0 0.0
        %418 = vmatpush1.xpose.msra.mxu0 %v394
        %419 = vmatprep.subr.mxu0 0.0
        %420 = vmatpush1.xpose.msra.mxu0 %v395
        %421 = vmatprep.subr.mxu0 0.0
        %422 = vmatpush1.xpose.msra.mxu0 %v396
        %423 = vmatprep.subr.mxu0 0.0
        %424 = vmatpush1.xpose.msra.mxu0 %v397
        %425 = vmatprep.subr.mxu0 0.0
        %426 = vmatpush1.xpose.msra.mxu0 %v398
        %427 = vmatprep.subr.mxu0 0.0
        %428 = vmatpush1.xpose.msra.mxu0 %v399
        %429 = vmatprep.subr.mxu0 0.0
        %430 = vmatpush1.xpose.msra.mxu0 %v400
        %431 = vmatprep.subr.mxu0 0.0
        %432 = vmatpush1.xpose.msra.mxu0 %v401
        %433 = vmatprep.subr.mxu0 0.0
        %434 = vmatpush1.xpose.msra.mxu0 %v402
        %435 = vmatprep.subr.mxu0 0.0
        %436 = vmatpush1.xpose.msra.mxu0 %v403
        %437 = vmatprep.subr.mxu0 0.0
        %438 = vmatpush1.xpose.msra.mxu0 %v404
        %439 = vmatprep.subr.mxu0 0.0
        %440 = vmatpush1.xpose.msra.mxu0 %v405
        %441 = vmatprep.subr.mxu0 0.0
        %442 = vmatpush1.xpose.msra.mxu0 %v406
        %443 = vmatprep.subr.mxu0 0.0
        %444 = vmatpush1.xpose.msra.mxu0 %v407
        %445 = vmatprep.subr.mxu0 0.0
        %446 = vmatpush1.xpose.msra.mxu0 %v408
        %447 = vmatprep.subr.mxu0 0.0
        %448 = vmatpush1.xpose.msra.mxu0 %v409
        %449 = vmatprep.subr.mxu0 0.0
        %450 = vmatpush1.xpose.msra.mxu0 0.0
        %451 = vmatprep.subr.mxu0 0.0
        %452 = vmatpush1.xpose.msra.mxu0 0.0
        %453 = vmatprep.subr.mxu0 0.0
        %454 = vmatpush1.xpose.msra.mxu0 0.0
        %455 = vmatprep.subr.mxu0 0.0
        %456 = vmatpush1.xpose.msra.mxu0 0.0
        %457 = vmatprep.subr.mxu0 0.0
        %458 = vmatpush1.xpose.msra.mxu0 0.0
        %459 = vmatprep.subr.mxu0 0.0
        %460 = vmatpush1.xpose.msra.mxu0 0.0
        %461 = vmatprep.subr.mxu0 0.0
        %462 = vmatpush1.xpose.msra.mxu0 0.0
        %463 = vmatprep.subr.mxu0 0.0
        %464 = vmatpush1.xpose.msra.mxu0 0.0
        %465 = vmatprep.subr.mxu0 0.0
        %466 = vmatpush1.xpose.msra.mxu0 0.0
        %467 = vmatprep.subr.mxu0 0.0
        %468 = vmatpush1.xpose.msra.mxu0 0.0
        %469 = vmatprep.subr.mxu0 0.0
        %470 = vmatpush1.xpose.msra.mxu0 0.0
        %471 = vmatprep.subr.mxu0 0.0
        %472 = vmatpush1.xpose.msra.mxu0 0.0
        %473 = vmatprep.subr.mxu0 0.0
        %474 = vmatpush1.xpose.msra.mxu0 0.0
        %475 = vmatprep.subr.mxu0 0.0
        %476 = vmatpush1.xpose.msra.mxu0 0.0
        %477 = vmatprep.subr.mxu0 0.0
        %478 = vmatpush1.xpose.msra.mxu0 0.0
        %479 = vmatprep.subr.mxu0 0.0
        %480 = vmatpush1.xpose.msra.mxu0 0.0
        %481 = vmatprep.mubr.f32.mxu0 0.0
        %482 = vmatmul.mubr.f32.gmra.mrb[0].mxu0 %v393
        %v483 = vpop.f32.mrb[0].mxu0
        %v484 = vadd.f32 %v415, %v483
        %v485 = vpop.f32.mrb[0].mxu0
        %486 = vdwg.mxu0
        %487 = vmax.xlane.f32.xlu0 %v484
        %v488 = vpop.xlane.xlu0 %487
        %v489 = vsub.f32 %v484, %v488
        %v490 = vmul.f32 %v489, 1.442695
        %v491 = vpow.pop %v490
        %492 = vadd.xlane.f32.xlu0 %v491
        %v493 = vpop.xlane.xlu0 %492
        %v494 = vrcp.pop %v493
        %v495 = vmul.f32 %v491, %v494
        %496 = vst [vmem:[%s392] sm:$0xff] %v495
        %497 = vmatprep.subr.mxu0 0.0
        %498 = vmatpush1.msra.mxu0 %v394
        %499 = vmatprep.subr.mxu0 0.0
        %500 = vmatpush1.msra.mxu0 %v395
        %501 = vmatprep.subr.mxu0 0.0
        %502 = vmatpush1.msra.mxu0 %v396
        %503 = vmatprep.subr.mxu0 0.0
        %504 = vmatpush1.msra.mxu0 %v397
        %505 = vmatprep.subr.mxu0 0.0
        %506 = vmatpush1.msra.mxu0 %v398
        %507 = vmatprep.subr.mxu0 0.0
        %508 = vmatpush1.msra.mxu0 %v399
        %509 = vmatprep.subr.mxu0 0.0
        %510 = vmatpush1.msra.mxu0 %v400
        %511 = vmatprep.subr.mxu0 0.0
        %512 = vmatpush1.msra.mxu0 %v401
        %513 = vmatprep.subr.mxu0 0.0
        %514 = vmatpush1.msra.mxu0 %v402
        %515 = vmatprep.subr.mxu0 0.0
        %516 = vmatpush1.msra.mxu0 %v403
        %517 = vmatprep.subr.mxu0 0.0
        %518 = vmatpush1.msra.mxu0 %v404
        %519 = vmatprep.subr.mxu0 0.0
        %520 = vmatpush1.msra.mxu0 %v405
        %521 = vmatprep.subr.mxu0 0.0
        %522 = vmatpush1.msra.mxu0 %v406
        %523 = vmatprep.subr.mxu0 0.0
        %524 = vmatpush1.msra.mxu0 %v407
        %525 = vmatprep.subr.mxu0 0.0
        %526 = vmatpush1.msra.mxu0 %v408
        %527 = vmatprep.subr.mxu0 0.0
        %528 = vmatpush1.msra.mxu0 %v409
        %529 = vmatprep.subr.mxu0 0.0
        %530 = vmatpush1.msra.mxu0 0.0
        %531 = vmatprep.subr.mxu0 0.0
        %532 = vmatpush1.msra.mxu0 0.0
        %533 = vmatprep.subr.mxu0 0.0
        %534 = vmatpush1.msra.mxu0 0.0
        %535 = vmatprep.subr.mxu0 0.0
        %536 = vmatpush1.msra.mxu0 0.0
        %537 = vmatprep.subr.mxu0 0.0
        %538 = vmatpush1.msra.mxu0 0.0
        %539 = vmatprep.subr.mxu0 0.0
        %540 = vmatpush1.msra.mxu0 0.0
        %541 = vmatprep.subr.mxu0 0.0
        %542 = vmatpush1.msra.mxu0 0.0
        %543 = vmatprep.subr.mxu0 0.0
        %544 = vmatpush1.msra.mxu0 0.0
        %545 = vmatprep.subr.mxu0 0.0
        %546 = vmatpush1.msra.mxu0 0.0
        %547 = vmatprep.subr.mxu0 0.0
        %548 = vmatpush1.msra.mxu0 0.0
        %549 = vmatprep.subr.mxu0 0.0
        %550 = vmatpush1.msra.mxu0 0.0
        %551 = vmatprep.subr.mxu0 0.0
        %552 = vmatpush1.msra.mxu0 0.0
        %553 = vmatprep.subr.mxu0 0.0
        %554 = vmatpush1.msra.mxu0 0.0
        %555 = vmatprep.subr.mxu0 0.0
        %556 = vmatpush1.msra.mxu0 0.0
        %557 = vmatprep.subr.mxu0 0.0
        %558 = vmatpush1.msra.mxu0 0.0
        %559 = vmatprep.subr.mxu0 0.0
        %560 = vmatpush1.msra.mxu0 0.0
        %561 = vmatprep.mubr.f32.mxu0 0.0
        %562 = vmatmul.mubr.f32.gmra.mrb[0].mxu0 %v495
        %v563 = vpop.f32.mrb[0].mxu0
        %v564 = vadd.f32 0.0, %v563
        %v565 = vpop.f32.mrb[0].mxu0
        %566 = vdwg.mxu0
        %v567 = vld [vmem:[#allocation7] sm:$0xff]
        %v568 = vld [vmem:[#allocation7 + $0x8] sm:$0xff]
        %v569 = vld [vmem:[#allocation7 + $0x10] sm:$0xff]
        %v570 = vld [vmem:[#allocation7 + $0x18] sm:$0xff]
        %v571 = vld [vmem:[#allocation7 + $0x20] sm:$0xff]
        %v572 = vld [vmem:[#allocation7 + $0x28] sm:$0xff]
        %v573 = vld [vmem:[#allocation7 + $0x30] sm:$0xff]
        %v574 = vld [vmem:[#allocation7 + $0x38] sm:$0xff]
        %v575 = vld [vmem:[#allocation7 + $0x40] sm:$0xff]
        %v576 = vld [vmem:[#allocation7 + $0x48] sm:$0xff]
        %v577 = vld [vmem:[#allocation7 + $0x50] sm:$0xff]
        %v578 = vld [vmem:[#allocation7 + $0x58] sm:$0xff]
        %v579 = vld [vmem:[#allocation7 + $0x60] sm:$0xff]
        %v580 = vld [vmem:[#allocation7 + $0x68] sm:$0xff]
        %v581 = vld [vmem:[#allocation7 + $0x70] sm:$0xff]
        %v582 = vld [vmem:[#allocation7 + $0x78] sm:$0xff]
        %v583 = vld [vmem:[#allocation8] sm:$0xff]
        %v584 = vld [vmem:[#allocation8 + $0x8] sm:$0xff]
        %v585 = vld [vmem:[#allocation8 + $0x10] sm:$0xff]
        %v586 = vld [vmem:[#allocation8 + $0x18] sm:$0xff]
        %v587 = vld [vmem:[#allocation8 + $0x20] sm:$0xff]
        %v588 = vld [vmem:[#allocation8 + $0x28] sm:$0xff]
        %v589 = vld [vmem:[#allocation8 + $0x30] sm:$0xff]
        %v590 = vld [vmem:[#allocation8 + $0x38] sm:$0xff]
        %v591 = vld [vmem:[#allocation8 + $0x40] sm:$0xff]
        %v592 = vld [vmem:[#allocation8 + $0x48] sm:$0xff]
        %v593 = vld [vmem:[#allocation8 + $0x50] sm:$0xff]
        %v594 = vld [vmem:[#allocation8 + $0x58] sm:$0xff]
        %v595 = vld [vmem:[#allocation8 + $0x60] sm:$0xff]
        %v596 = vld [vmem:[#allocation8 + $0x68] sm:$0xff]
        %v597 = vld [vmem:[#allocation8 + $0x70] sm:$0xff]
        %v598 = vld [vmem:[#allocation8 + $0x78] sm:$0xff]
        %599 = vmatprep.subr.mxu0 0.0
        %600 = vmatpush1.msra.mxu0 %v583
        %601 = vmatprep.subr.mxu0 0.0
        %602 = vmatpush1.msra.mxu0 %v584
        %603 = vmatprep.subr.mxu0 0.0
        %604 = vmatpush1.msra.mxu0 %v585
        %605 = vmatprep.subr.mxu0 0.0
        %606 = vmatpush1.msra.mxu0 %v586
        %607 = vmatprep.subr.mxu0 0.0
        %608 = vmatpush1.msra.mxu0 %v587
        %609 = vmatprep.subr.mxu0 0.0
        %610 = vmatpush1.msra.mxu0 %v588
        %611 = vmatprep.subr.mxu0 0.0
        %612 = vmatpush1.msra.mxu0 %v589
        %613 = vmatprep.subr.mxu0 0.0
        %614 = vmatpush1.msra.mxu0 %v590
        %615 = vmatprep.subr.mxu0 0.0
        %616 = vmatpush1.msra.mxu0 %v591
        %617 = vmatprep.subr.mxu0 0.0
        %618 = vmatpush1.msra.mxu0 %v592
        %619 = vmatprep.subr.mxu0 0.0
        %620 = vmatpush1.msra.mxu0 %v593
        %621 = vmatprep.subr.mxu0 0.0
        %622 = vmatpush1.msra.mxu0 %v594
        %623 = vmatprep.subr.mxu0 0.0
        %624 = vmatpush1.msra.mxu0 %v595
        %625 = vmatprep.subr.mxu0 0.0
        %626 = vmatpush1.msra.mxu0 %v596
        %627 = vmatprep.subr.mxu0 0.0
        %628 = vmatpush1.msra.mxu0 %v597
        %629 = vmatprep.subr.mxu0 0.0
        %630 = vmatpush1.msra.mxu0 %v598
        %631 = vmatprep.subr.mxu0 0.0
        %632 = vmatpush1.msra.mxu0 0.0
        %633 = vmatprep.subr.mxu0 0.0
        %634 = vmatpush1.msra.mxu0 0.0
        %635 = vmatprep.subr.mxu0 0.0
        %636 = vmatpush1.msra.mxu0 0.0
        %637 = vmatprep.subr.mxu0 0.0
        %638 = vmatpush1.msra.mxu0 0.0
        %639 = vmatprep.subr.mxu0 0.0
        %640 = vmatpush1.msra.mxu0 0.0
        %641 = vmatprep.subr.mxu0 0.0
        %642 = vmatpush1.msra.mxu0 0.0
        %643 = vmatprep.subr.mxu0 0.0
        %644 = vmatpush1.msra.mxu0 0.0
        %645 = vmatprep.subr.mxu0 0.0
        %646 = vmatpush1.msra.mxu0 0.0
        %647 = vmatprep.subr.mxu0 0.0
        %648 = vmatpush1.msra.mxu0 0.0
        %649 = vmatprep.subr.mxu0 0.0
        %650 = vmatpush1.msra.mxu0 0.0
        %651 = vmatprep.subr.mxu0 0.0
        %652 = vmatpush1.msra.mxu0 0.0
        %653 = vmatprep.subr.mxu0 0.0
        %654 = vmatpush1.msra.mxu0 0.0
        %655 = vmatprep.subr.mxu0 0.0
        %656 = vmatpush1.msra.mxu0 0.0
        %657 = vmatprep.subr.mxu0 0.0
        %658 = vmatpush1.msra.mxu0 0.0
        %659 = vmatprep.subr.mxu0 0.0
        %660 = vmatpush1.msra.mxu0 0.0
        %661 = vmatprep.subr.mxu0 0.0
        %662 = vmatpush1.msra.mxu0 0.0
        %663 = vmatprep.mubr.f32.mxu0 0.0
        %664 = vmatmul.mubr.f32.gmra.mrb[0].mxu0 %v393
        %v665 = vpop.f32.mrb[0].mxu0
        %v666 = vadd.f32 0.0, %v665
        %v667 = vpop.f32.mrb[0].mxu0
        %668 = vdwg.mxu0
        %669 = vmatprep.subr.mxu0 0.0
        %670 = vmatpush1.msra.mxu0 %v567
        %671 = vmatprep.subr.mxu0 0.0
        %672 = vmatpush1.msra.mxu0 %v568
        %673 = vmatprep.subr.mxu0 0.0
        %674 = vmatpush1.msra.mxu0 %v569
        %675 = vmatprep.subr.mxu0 0.0
        %676 = vmatpush1.msra.mxu0 %v570
        %677 = vmatprep.subr.mxu0 0.0
        %678 = vmatpush1.msra.mxu0 %v571
        %679 = vmatprep.subr.mxu0 0.0
        %680 = vmatpush1.msra.mxu0 %v572
        %681 = vmatprep.subr.mxu0 0.0
        %682 = vmatpush1.msra.mxu0 %v573
        %683 = vmatprep.subr.mxu0 0.0
        %684 = vmatpush1.msra.mxu0 %v574
        %685 = vmatprep.subr.mxu0 0.0
        %686 = vmatpush1.msra.mxu0 %v575
        %687 = vmatprep.subr.mxu0 0.0
        %688 = vmatpush1.msra.mxu0 %v576
        %689 = vmatprep.subr.mxu0 0.0
        %690 = vmatpush1.msra.mxu0 %v577
        %691 = vmatprep.subr.mxu0 0.0
        %692 = vmatpush1.msra.mxu0 %v578
        %693 = vmatprep.subr.mxu0 0.0
        %694 = vmatpush1.msra.mxu0 %v579
        %695 = vmatprep.subr.mxu0 0.0
        %696 = vmatpush1.msra.mxu0 %v580
        %697 = vmatprep.subr.mxu0 0.0
        %698 = vmatpush1.msra.mxu0 %v581
        %699 = vmatprep.subr.mxu0 0.0
        %700 = vmatpush1.msra.mxu0 %v582
        %701 = vmatprep.subr.mxu0 0.0
        %702 = vmatpush1.msra.mxu0 0.0
        %703 = vmatprep.subr.mxu0 0.0
        %704 = vmatpush1.msra.mxu0 0.0
        %705 = vmatprep.subr.mxu0 0.0
        %706 = vmatpush1.msra.mxu0 0.0
        %707 = vmatprep.subr.mxu0 0.0
        %708 = vmatpush1.msra.mxu0 0.0
        %709 = vmatprep.subr.mxu0 0.0
        %710 = vmatpush1.msra.mxu0 0.0
        %711 = vmatprep.subr.mxu0 0.0
        %712 = vmatpush1.msra.mxu0 0.0
        %713 = vmatprep.subr.mxu0 0.0
        %714 = vmatpush1.msra.mxu0 0.0
        %715 = vmatprep.subr.mxu0 0.0
        %716 = vmatpush1.msra.mxu0 0.0
        %717 = vmatprep.subr.mxu0 0.0
        %718 = vmatpush1.msra.mxu0 0.0
        %719 = vmatprep.subr.mxu0 0.0
        %720 = vmatpush1.msra.mxu0 0.0
        %721 = vmatprep.subr.mxu0 0.0
        %722 = vmatpush1.msra.mxu0 0.0
        %723 = vmatprep.subr.mxu0 0.0
        %724 = vmatpush1.msra.mxu0 0.0
        %725 = vmatprep.subr.mxu0 0.0
        %726 = vmatpush1.msra.mxu0 0.0
        %727 = vmatprep.subr.mxu0 0.0
        %728 = vmatpush1.msra.mxu0 0.0
        %729 = vmatprep.subr.mxu0 0.0
        %730 = vmatpush1.msra.mxu0 0.0
        %731 = vmatprep.subr.mxu0 0.0
        %732 = vmatpush1.msra.mxu0 0.0
        %733 = vmatprep.mubr.f32.mxu0 0.0
        %734 = vmatmul.mubr.f32.gmra.mrb[0].mxu0 %v564
        %v735 = vpop.f32.mrb[0].mxu0
        %v736 = vadd.f32 %v666, %v735
        %v737 = vpop.f32.mrb[0].mxu0
        %738 = vdwg.mxu0
        %v739 = vld [vmem:[%s4] sm:$0x1]
        %v741 = vlaneseq
        %v742 = vshrl.u32 %v741, 7
        %v743 = vsub.s32 0, %v742
        %v744 = vrot.slane %v739, %v743
        %v746 = vadd.f32 %v736, %v744
        %v747 = vtanh.pop %v746
        %748 = vst [vmem:[%s385] sm:$0xff] %v747
        %s749 = sand.u32 %s192, 1
        %s750 = scalar_lea.sflag [#allocation4], %s749
        %s751 = sand.u32 %s192, 1
        %s752 = smul.addr %s751, 8
        %s753 = scalar_lea.vmem [#allocation10], %s752
        %s754 = sand.u32 %s220, 1
        %s755 = scalar_lea.sflag [#allocation12], %s754
        %s756 = sand.u32 %s220, 1
        %s757 = smul.addr %s756, 8
        %s758 = scalar_lea.vmem [#allocation11], %s757
        // Predicated region
        $region61: #{tpu_custom_call.1} parent=43 // pred_check
          %p759 = pneg %p202
        $region62: #{tpu_custom_call.1} parent=43 // pred_check_branch
          %761 = sbr.rel (%p759) target = $region64
        $region63: #{tpu_custom_call.1} parent=43 // pred_region
          %s763 = ssub.s32 128, 128
          %764 = vsyncadd %s750, %s763
          %s765 = sadd.s32 %s37, %s36
          %s766 = smul.addr %s765, 128
          %s767 = scalar_lea.hbm %s6, %s766
          %s769 = sshll.u32 %s753, 4
          %s770 = int_to_ptr.vmem [resolvable:$true] %s769
          %772 = dma.vmem_to_hbm [thread:$0]  %s770, 128, %s767, %s750
        $region64: #{tpu_custom_call.1} parent=43 // pred_fallthru
          _
        // Predicated region
        $region65: #{tpu_custom_call.1} parent=43 // pred_check
          %p773 = pneg %p230
        $region66: #{tpu_custom_call.1} parent=43 // pred_check_branch
          %775 = sbr.rel (%p773) target = $region68
        $region67: #{tpu_custom_call.1} parent=43 // pred_region
          %s777 = ssub.s32 128, 128
          %778 = vsyncadd %s755, %s777
          %s779 = sadd.s32 %s37, %s36
          %s780 = smul.addr %s779, 128
          %s781 = scalar_lea.hbm %s7, %s780
          %s783 = sshll.u32 %s758, 4
          %s784 = int_to_ptr.vmem [resolvable:$true] %s783
          %786 = dma.vmem_to_hbm [thread:$0]  %s784, 128, %s781, %s755
        $region68: #{tpu_custom_call.1} parent=43 // pred_fallthru
          _
      $region44: #{tpu_custom_call.1} parent=5 // pred_fallthru
        _
      %p787 = scmp.le.s32.totalorder 2, %s27
      // Predicated region
      $region69: #{tpu_custom_call.1} parent=5 // pred_check
        %p788 = pneg %p787
      $region70: #{tpu_custom_call.1} parent=5 // pred_check_branch
        %790 = sbr.rel (%p788) target = $region72
      $region71: #{tpu_custom_call.1} parent=5 // pred_region
        %s791 = ssub.s32 %s27, 2
        // Predicated region
        $region73: #{tpu_custom_call.1} parent=71 // pred_check
          %p792 = pneg %p208
        $region74: #{tpu_custom_call.1} parent=71 // pred_check_branch
          %794 = sbr.rel (%p792) target = $region76
        $region75: #{tpu_custom_call.1} parent=71 // pred_region
          %s795 = sand.u32 %s193, 1
          %s796 = scalar_lea.sflag [#allocation4], %s795
          %s797 = sand.u32 %s193, 1
          %s798 = smul.addr %s797, 8
          %s799 = scalar_lea.vmem [#allocation10], %s798
          %800 = dma.done %s796, 128
        $region76: #{tpu_custom_call.1} parent=71 // pred_fallthru
          _
        // Predicated region
        $region77: #{tpu_custom_call.1} parent=71 // pred_check
          %p801 = pneg %p236
        $region78: #{tpu_custom_call.1} parent=71 // pred_check_branch
          %803 = sbr.rel (%p801) target = $region80
        $region79: #{tpu_custom_call.1} parent=71 // pred_region
          %s804 = sand.u32 %s221, 1
          %s805 = scalar_lea.sflag [#allocation12], %s804
          %s806 = sand.u32 %s221, 1
          %s807 = smul.addr %s806, 8
          %s808 = scalar_lea.vmem [#allocation11], %s807
          %809 = dma.done %s805, 128
        $region80: #{tpu_custom_call.1} parent=71 // pred_fallthru
          _
      $region72: #{tpu_custom_call.1} parent=5 // pred_fallthru
        _
    $region6: #{tpu_custom_call.1} parent=1 // loop_footer
      %s31 = sadd.s32 1, %s27
    $region7: #{tpu_custom_call.1} parent=1 // loop_footer_branch
      %26 = sbr.rel target = $region3
    $region8: #{tpu_custom_call.1} parent=1 // loop_exit
      _
    %810 = vsyncpa [#allocation3], 1
    %s811 = scalar_lea.sflag [#allocation3], 1
    %812 = vsyncpa %s811, 1
    %813 = vsyncpa [#allocation6], 1
    %s814 = scalar_lea.sflag [#allocation6], 1
    %815 = vsyncpa %s814, 1
    %816 = vsyncpa [#allocation9], 1
    %817 = vsyncpa [#allocation4], 1
    %s818 = scalar_lea.sflag [#allocation4], 1
    %819 = vsyncpa %s818, 1
    %820 = vsyncpa [#allocation12], 1
    %s821 = scalar_lea.sflag [#allocation12], 1
    %822 = vsyncpa %s821, 1

</llo_original>
